<compile_context>
chip_gen: v7x
topology: tpu7x:2x2x1
jax: 0.10.0
libtpu: 0.0.40
codegen_flags: <defaults>
</compile_context>

<pallas_src>
import functools

import jax
import jax.numpy as jnp
from jax.experimental import pallas as pl
from jax.experimental.pallas import tpu as pltpu


def _ce_kernel(logits_ref, labels_ref, loss_ref, *, ignore_lb, num_classes):
    """Per-pixel cross-entropy.

    logits_ref: (C, R, 128)   labels_ref: (R, 128) int32   loss_ref: (R, 128) f32
    Class reduction = unrolled elementwise loop over C lane-dense planes.
    f32 accumulation throughout (bf16 exp path on v6e/v7x left out on purpose;
    it would need re-validation against the f32 reference).
    """
    lbl = labels_ref[...]                                    # (R, 128) int32

    # Running max over classes: elementwise max of C (R,128) planes (VPU).
    m = logits_ref[0].astype(jnp.float32)
    for c in range(1, num_classes):
        m = jnp.maximum(m, logits_ref[c].astype(jnp.float32))

    # Sum of exp and target-class logit in one pass over the classes.
    s = jnp.zeros_like(m)
    picked = jnp.zeros_like(m)
    for c in range(num_classes):
        xc = logits_ref[c].astype(jnp.float32)
        s = s + jnp.exp(xc - m)                              # EUP slot
        picked = picked + jnp.where(lbl == c, xc, 0.0)       # VPU slot

    loss = jnp.log(s) + m - picked
    # nn.CrossEntropyLoss(ignore_index=ignore_lb, reduction='none') -> loss 0
    loss_ref[...] = jnp.where(lbl != ignore_lb, loss, 0.0)


def _pick_rows_per_tile(total_rows, max_rows):
    """Largest row-tile (multiple of 8, or the full extent) dividing total_rows."""
    if total_rows <= max_rows:
        return total_rows
    r = (max_rows // 8) * 8
    while r >= 8:
        if total_rows % r == 0:
            return r
        r -= 8
    return None


def per_pixel_ce(logits_nchw, labels_nhw, ignore_lb=255):
    """Per-pixel CE (reduction='none'); returns a flat (N*H*W,) f32 loss vector."""
    N, C, H, W = logits_nchw.shape
    HW = H * W

    logits = logits_nchw.reshape(N, C, HW)
    labels = labels_nhw.reshape(N, HW).astype(jnp.int32)

    # --- lane padding (rare): H*W must be a multiple of 128 for the 4D view.
    HWp = pl.cdiv(HW, 128) * 128
    if HWp != HW:
        # TODO(synk): pads the full logits tensor (one extra HBM copy); typical
        # segmentation shapes (H*W % 128 == 0) never take this path.
        logits = jnp.pad(logits, ((0, 0), (0, 0), (0, HWp - HW)))
        labels = jnp.pad(labels, ((0, 0), (0, HWp - HW)),
                         constant_values=ignore_lb)
    rows = HWp // 128
    logits4 = logits.reshape(N, C, rows, 128)   # free reshape, no transpose
    labels4 = labels.reshape(N, rows, 128)

    # --- tile sizing from a generation-aware VMEM budget --------------------
    try:
        info = pltpu.get_tpu_info()
        vmem_cap = int(getattr(info, "vmem_capacity_bytes", 64 * 1024 * 1024))
    except Exception:
        vmem_cap = 64 * 1024 * 1024              # conservative (v7x per-TC)
    in_item = jnp.dtype(logits_nchw.dtype).itemsize
    # double-buffered logits + labels(i32) + loss(f32), per pixel
    bytes_per_pixel = 2 * (C * in_item + 4 + 4)
    budget = vmem_cap // 4                       # ample headroom on all gens
    max_rows = max(8, (budget // (128 * bytes_per_pixel)) // 8 * 8)

    # v7x megacore balance: keep >= 2 programs so both TensorCores get work.
    if N * pl.cdiv(rows, max_rows) < 2 and rows >= 16:
        max_rows = max(8, (pl.cdiv(rows, 2) // 8) * 8)

    rows_per_tile = _pick_rows_per_tile(rows, max_rows)
    if rows_per_tile is None:
        # TODO(synk): rare fallback — no multiple-of-8 divisor of HW//128 fits
        # the VMEM budget; pad the row axis (extra HBM copy of logits).
        rows_per_tile = max(8, (max_rows // 8) * 8)
        rows_p = pl.cdiv(rows, rows_per_tile) * rows_per_tile
        logits4 = jnp.pad(logits4, ((0, 0), (0, 0), (0, rows_p - rows), (0, 0)))
        labels4 = jnp.pad(labels4, ((0, 0), (0, rows_p - rows), (0, 0)),
                          constant_values=ignore_lb)
        rows = rows_p

    grid = (N, rows // rows_per_tile)

    loss4 = pl.pallas_call(
        functools.partial(_ce_kernel, ignore_lb=ignore_lb, num_classes=C),
        out_shape=jax.ShapeDtypeStruct((N, rows, 128), jnp.float32),
        grid_spec=pltpu.PrefetchScalarGridSpec(
            num_scalar_prefetch=0,
            grid=grid,
            in_specs=[
                pl.BlockSpec((None, C, rows_per_tile, 128),
                             lambda n, j: (n, 0, j, 0)),
                pl.BlockSpec((None, rows_per_tile, 128),
                             lambda n, j: (n, j, 0)),
            ],
            out_specs=pl.BlockSpec((None, rows_per_tile, 128),
                                   lambda n, j: (n, j, 0)),
        ),
        compiler_params=pltpu.CompilerParams(
            # both axes independent -> shardable across v7x's 2 TensorCores
            dimension_semantics=("parallel", "parallel"),
            vmem_limit_bytes=int(vmem_cap // 2)),
    )(logits4, labels4)

    loss = loss4.reshape(N, -1)
    if loss.shape[1] != HW:
        loss = loss[:, :HW]   # drop padding; cheap (loss is ~1/C of logits)
    return loss.reshape(-1)


def ohem_ce_loss(logits, labels, thresh=0.7, n_min=32, ignore_lb=255):
    """Forward pass of OhemCELoss (same semantics as the PyTorch module)."""
    loss = per_pixel_ce(logits, labels, ignore_lb=ignore_lb)
    thresh_val = -jnp.log(jnp.float32(thresh))

    # sorted(loss, desc)[n_min] > thresh  <=>  count(loss > thresh) > n_min
    over = loss > thresh_val
    cnt = jnp.sum(over.astype(jnp.int32))
    sum_over = jnp.sum(jnp.where(over, loss, 0.0))
    use_thresh = cnt > n_min

    # Branch A (threshold): masked mean; cnt >= n_min + 1 >= 1 whenever taken,
    # so the max(cnt, 1) guard never changes the selected value.
    mean_thresh = sum_over / jnp.maximum(cnt.astype(jnp.float32), 1.0)

    # Branch B (top-k): only runs when the threshold branch is not taken.
    # TODO(synk): the full-vector top-k itself stays in plain JAX (no clean
    # Pallas TPU equivalent); it is gated behind lax.cond so the common
    # threshold path never pays for it.
    def _topk_mean():
        topk, _ = jax.lax.top_k(loss, n_min)
        return jnp.mean(topk)

    return jax.lax.cond(use_thresh, lambda: mean_thresh, _topk_mean)


def _ohem_ce_loss_ref(logits, labels, thresh=0.7, n_min=32, ignore_lb=255):
    """Pure-JAX reference (mirrors PyTorch semantics) for verification."""
    N, C, H, W = logits.shape
    x = jnp.transpose(logits, (0, 2, 3, 1)).reshape(-1, C).astype(jnp.float32)
    lbl = labels.reshape(-1).astype(jnp.int32)
    logp = jax.nn.log_softmax(x, axis=-1)
    safe = jnp.where(lbl == ignore_lb, 0, lbl)
    loss = -jnp.take_along_axis(logp, safe[:, None], axis=-1)[:, 0]
    loss = jnp.where(lbl == ignore_lb, 0.0, loss)
    loss = jnp.sort(loss)[::-1]
    thresh_val = -jnp.log(jnp.float32(thresh))
    if loss[n_min] > thresh_val:
        kept = loss[loss > thresh_val]
    else:
        kept = loss[:n_min]
    return jnp.mean(kept)


if __name__ == "__main__":
    key = jax.random.PRNGKey(0)
    k1, k2, k3 = jax.random.split(key, 3)

    N, C, H, W = 2, 4, 16, 16
    thresh = 0.7
    n_min = N * H * W // 16          # 32, as typical OHEM config
    ignore_lb = 255

    logits = jax.random.normal(k1, (N, C, H, W), dtype=jnp.float32) * 3.0
    labels = jax.random.randint(k2, (N, H, W), 0, C, dtype=jnp.int32)
    # sprinkle some ignored pixels
    ign_mask = jax.random.uniform(k3, (N, H, W)) < 0.1
    labels = jnp.where(ign_mask, ignore_lb, labels)

    fn = jax.jit(functools.partial(ohem_ce_loss, thresh=thresh, n_min=n_min,
                                   ignore_lb=ignore_lb))
    out = jax.block_until_ready(fn(logits, labels))

    ref = _ohem_ce_loss_ref(logits, labels, thresh=thresh, n_min=n_min,
                            ignore_lb=ignore_lb)
    assert jnp.allclose(out, ref, rtol=1e-5, atol=1e-5), (out, ref)

    print("KERNEL_OK")
</pallas_src>

<mosaic_0001>
module attributes {stable_mosaic.version = 11 : i64} {
  func.func @_ce_kernel(%arg0: i32, %arg1: i32, %arg2: memref<1x4x2x128xf32, #tpu.memory_space<vmem>>, %arg3: memref<1x2x128xi32, #tpu.memory_space<vmem>>, %arg4: memref<1x2x128xf32, #tpu.memory_space<vmem>>) attributes {dimension_semantics = [#tpu.dimension_semantics<parallel>, #tpu.dimension_semantics<parallel>], iteration_bounds = array<i64: 2, 1>, scalar_prefetch = 0 : i64, scratch_operands = 0 : i64, tpu.core_type = #tpu.core_type<tc>, window_params = [{transform_indices = @transform_0, window_bounds = array<i64: 1, 4, 2, 128>}, {transform_indices = @transform_1, window_bounds = array<i64: 1, 2, 128>}, {transform_indices = @transform_2, window_bounds = array<i64: 1, 2, 128>}]} {
    %c0 = arith.constant 0 : index
    %c0_0 = arith.constant 0 : index
    %c0_1 = arith.constant 0 : index
    %0 = vector.load %arg3[%c0, %c0_0, %c0_1] : memref<1x2x128xi32, #tpu.memory_space<vmem>>, vector<1x2x128xi32>
    %1 = vector.shape_cast %0 : vector<1x2x128xi32> to vector<2x128xi32>
    %c0_2 = arith.constant 0 : index
    %c0_3 = arith.constant 0 : index
    %c0_4 = arith.constant 0 : index
    %c0_5 = arith.constant 0 : index
    %2 = vector.load %arg2[%c0_2, %c0_3, %c0_4, %c0_5] : memref<1x4x2x128xf32, #tpu.memory_space<vmem>>, vector<1x1x2x128xf32>
    %3 = vector.shape_cast %2 : vector<1x1x2x128xf32> to vector<2x128xf32>
    %c0_6 = arith.constant 0 : index
    %c1 = arith.constant 1 : index
    %c0_7 = arith.constant 0 : index
    %c0_8 = arith.constant 0 : index
    %4 = vector.load %arg2[%c0_6, %c1, %c0_7, %c0_8] : memref<1x4x2x128xf32, #tpu.memory_space<vmem>>, vector<1x1x2x128xf32>
    %5 = vector.shape_cast %4 : vector<1x1x2x128xf32> to vector<2x128xf32>
    %6 = arith.maximumf %3, %5 : vector<2x128xf32>
    %c0_9 = arith.constant 0 : index
    %c2 = arith.constant 2 : index
    %c0_10 = arith.constant 0 : index
    %c0_11 = arith.constant 0 : index
    %7 = vector.load %arg2[%c0_9, %c2, %c0_10, %c0_11] : memref<1x4x2x128xf32, #tpu.memory_space<vmem>>, vector<1x1x2x128xf32>
    %8 = vector.shape_cast %7 : vector<1x1x2x128xf32> to vector<2x128xf32>
    %9 = arith.maximumf %6, %8 : vector<2x128xf32>
    %c0_12 = arith.constant 0 : index
    %c3 = arith.constant 3 : index
    %c0_13 = arith.constant 0 : index
    %c0_14 = arith.constant 0 : index
    %10 = vector.load %arg2[%c0_12, %c3, %c0_13, %c0_14] : memref<1x4x2x128xf32, #tpu.memory_space<vmem>>, vector<1x1x2x128xf32>
    %11 = vector.shape_cast %10 : vector<1x1x2x128xf32> to vector<2x128xf32>
    %12 = arith.maximumf %9, %11 : vector<2x128xf32>
    %cst = arith.constant 0.000000e+00 : f32
    %13 = vector.broadcast %cst : f32 to vector<2x128xf32>
    %cst_15 = arith.constant 0.000000e+00 : f32
    %14 = vector.broadcast %cst_15 : f32 to vector<2x128xf32>
    %c0_16 = arith.constant 0 : index
    %c0_17 = arith.constant 0 : index
    %c0_18 = arith.constant 0 : index
    %c0_19 = arith.constant 0 : index
    %15 = vector.load %arg2[%c0_16, %c0_17, %c0_18, %c0_19] : memref<1x4x2x128xf32, #tpu.memory_space<vmem>>, vector<1x1x2x128xf32>
    %16 = vector.shape_cast %15 : vector<1x1x2x128xf32> to vector<2x128xf32>
    %17 = arith.subf %16, %12 : vector<2x128xf32>
    %18 = math.exp %17 : vector<2x128xf32>
    %19 = arith.addf %13, %18 : vector<2x128xf32>
    %c0_i32 = arith.constant 0 : i32
    %20 = vector.broadcast %c0_i32 : i32 to vector<2x128xi32>
    %21 = arith.cmpi eq, %1, %20 : vector<2x128xi32>
    %cst_20 = arith.constant 0.000000e+00 : f32
    %22 = vector.broadcast %cst_20 : f32 to vector<2x128xf32>
    %23 = arith.select %21, %16, %22 : vector<2x128xi1>, vector<2x128xf32>
    %24 = arith.addf %14, %23 : vector<2x128xf32>
    %c0_21 = arith.constant 0 : index
    %c1_22 = arith.constant 1 : index
    %c0_23 = arith.constant 0 : index
    %c0_24 = arith.constant 0 : index
    %25 = vector.load %arg2[%c0_21, %c1_22, %c0_23, %c0_24] : memref<1x4x2x128xf32, #tpu.memory_space<vmem>>, vector<1x1x2x128xf32>
    %26 = vector.shape_cast %25 : vector<1x1x2x128xf32> to vector<2x128xf32>
    %27 = arith.subf %26, %12 : vector<2x128xf32>
    %28 = math.exp %27 : vector<2x128xf32>
    %29 = arith.addf %19, %28 : vector<2x128xf32>
    %c1_i32 = arith.constant 1 : i32
    %30 = vector.broadcast %c1_i32 : i32 to vector<2x128xi32>
    %31 = arith.cmpi eq, %1, %30 : vector<2x128xi32>
    %cst_25 = arith.constant 0.000000e+00 : f32
    %32 = vector.broadcast %cst_25 : f32 to vector<2x128xf32>
    %33 = arith.select %31, %26, %32 : vector<2x128xi1>, vector<2x128xf32>
    %34 = arith.addf %24, %33 : vector<2x128xf32>
    %c0_26 = arith.constant 0 : index
    %c2_27 = arith.constant 2 : index
    %c0_28 = arith.constant 0 : index
    %c0_29 = arith.constant 0 : index
    %35 = vector.load %arg2[%c0_26, %c2_27, %c0_28, %c0_29] : memref<1x4x2x128xf32, #tpu.memory_space<vmem>>, vector<1x1x2x128xf32>
    %36 = vector.shape_cast %35 : vector<1x1x2x128xf32> to vector<2x128xf32>
    %37 = arith.subf %36, %12 : vector<2x128xf32>
    %38 = math.exp %37 : vector<2x128xf32>
    %39 = arith.addf %29, %38 : vector<2x128xf32>
    %c2_i32 = arith.constant 2 : i32
    %40 = vector.broadcast %c2_i32 : i32 to vector<2x128xi32>
    %41 = arith.cmpi eq, %1, %40 : vector<2x128xi32>
    %cst_30 = arith.constant 0.000000e+00 : f32
    %42 = vector.broadcast %cst_30 : f32 to vector<2x128xf32>
    %43 = arith.select %41, %36, %42 : vector<2x128xi1>, vector<2x128xf32>
    %44 = arith.addf %34, %43 : vector<2x128xf32>
    %c0_31 = arith.constant 0 : index
    %c3_32 = arith.constant 3 : index
    %c0_33 = arith.constant 0 : index
    %c0_34 = arith.constant 0 : index
    %45 = vector.load %arg2[%c0_31, %c3_32, %c0_33, %c0_34] : memref<1x4x2x128xf32, #tpu.memory_space<vmem>>, vector<1x1x2x128xf32>
    %46 = vector.shape_cast %45 : vector<1x1x2x128xf32> to vector<2x128xf32>
    %47 = arith.subf %46, %12 : vector<2x128xf32>
    %48 = math.exp %47 : vector<2x128xf32>
    %49 = arith.addf %39, %48 : vector<2x128xf32>
    %c3_i32 = arith.constant 3 : i32
    %50 = vector.broadcast %c3_i32 : i32 to vector<2x128xi32>
    %51 = arith.cmpi eq, %1, %50 : vector<2x128xi32>
    %cst_35 = arith.constant 0.000000e+00 : f32
    %52 = vector.broadcast %cst_35 : f32 to vector<2x128xf32>
    %53 = arith.select %51, %46, %52 : vector<2x128xi1>, vector<2x128xf32>
    %54 = arith.addf %44, %53 : vector<2x128xf32>
    %55 = math.log %49 : vector<2x128xf32>
    %56 = arith.addf %55, %12 : vector<2x128xf32>
    %57 = arith.subf %56, %54 : vector<2x128xf32>
    %c255_i32 = arith.constant 255 : i32
    %58 = vector.broadcast %c255_i32 : i32 to vector<2x128xi32>
    %59 = arith.cmpi ne, %1, %58 : vector<2x128xi32>
    %cst_36 = arith.constant 0.000000e+00 : f32
    %60 = vector.broadcast %cst_36 : f32 to vector<2x128xf32>
    %61 = arith.select %59, %57, %60 : vector<2x128xi1>, vector<2x128xf32>
    %c0_37 = arith.constant 0 : index
    %c0_38 = arith.constant 0 : index
    %c0_39 = arith.constant 0 : index
    %62 = vector.load %arg4[%c0_37, %c0_38, %c0_39] : memref<1x2x128xf32, #tpu.memory_space<vmem>>, vector<1x2x128xf32>
    %63 = vector.shape_cast %62 : vector<1x2x128xf32> to vector<2x128xf32>
    %64 = vector.shape_cast %61 : vector<2x128xf32> to vector<1x2x128xf32>
    tpu.vector_store %arg4[%c0_37, %c0_38, %c0_39], %64 {strides = array<i32>} : memref<1x2x128xf32, #tpu.memory_space<vmem>>, vector<1x2x128xf32>,
    return
  }
  func.func @transform_0(%arg0: i32, %arg1: i32) -> (i32, i32, i32, i32) {
    %c0_i32 = arith.constant 0 : i32
    %c0_i32_0 = arith.constant 0 : i32
    %c0_i32_1 = arith.constant 0 : i32
    return %arg0, %c0_i32, %arg1, %c0_i32_0 : i32, i32, i32, i32
  }
  func.func @transform_1(%arg0: i32, %arg1: i32) -> (i32, i32, i32) {
    %c0_i32 = arith.constant 0 : i32
    %c0_i32_0 = arith.constant 0 : i32
    return %arg0, %arg1, %c0_i32 : i32, i32, i32
  }
  func.func @transform_2(%arg0: i32, %arg1: i32) -> (i32, i32, i32) {
    %c0_i32 = arith.constant 0 : i32
    %c0_i32_0 = arith.constant 0 : i32
    return %arg0, %arg1, %c0_i32 : i32, i32, i32
  }
}

</mosaic_0001>

<llo_original>
// kernel: ohem_ce_loss.1
$region0: #{ohem_ce_loss.1}
  #allocation0 [shape = 'u32[]', space=smem, size = 0x4, offset = 0x4, fixed_abs, tag = 'smem constant byte address 0x4 - core index']
  #allocation1 [shape = 'u32[144,128]{1,0:T(1,128)}', space=vmem, size = 0x12000, scoped, tag = 'internal scratch']
  %s0 = inlined_call_operand.vmem [shape: f32[2,4,2,128], index: 0, kind: input, shape index: {}]
  %s1 = inlined_call_operand.vmem [shape: s32[2,2,128], index: 1, kind: input, shape index: {}]
  %s2 = inlined_call_operand.vmem [shape: f32[2,2,128], index: 2, kind: output, shape index: {}]
  %s3 = sld [smem:[#allocation0]]
  $region41: #{ohem_ce_loss.1} parent=0
    _
  %s5 = ssub.s32 1, %s3
  %s6 = scalar_select 0, %s5, %s3
  loop: start=0, step=1, limit=4
  $region2: #{ohem_ce_loss.1} parent=0 // loop_pre_header
    _
  $region3: #{ohem_ce_loss.1} parent=0 // loop_header
    %s8 = sphi 0, %s12
    %p9 = scmp.ge.s32.totalorder %s8, 4
    %s15 = sphi 0, %s27
    %s16 = sphi 0, %s23
    %s17 = sphi 0, %s15
    %s18 = sphi 0, %s16
    %s19 = sphi 0, %s17
    %s20 = sphi 0, %s18
    %s32 = sphi 0, %s34
    %s35 = sphi 0, %s32
    %s36 = sphi 0, %s35
    %s52 = sphi 0, %s36
    %s60 = sphi 0, %s62
    %s63 = sphi 0, %s60
    %s64 = sphi 0, %s63
    %s80 = sphi 0, %s64
    %s88 = sphi 0, %s90
    %s91 = sphi 0, %s88
    %s92 = sphi 0, %s91
    %s108 = sphi 0, %s92
  $region4: #{ohem_ce_loss.1} parent=0 // loop_header_branch
    %11 = sbr.rel (%p9) target = $region8
  $region5: #{ohem_ce_loss.1} parent=0 // loop_body
    %s13 = ssub.s32 %s8, 1
    %s14 = ssub.s32 %s8, 2
    %s21 = sadd.s32 1, %s16
    %p22 = scmp.ge.s32.totalorder %s21, 1
    %s23 = scalar_select %p22, 0, %s21
    %s24 = sadd.s32 1, %s15
    %s25 = scalar_select %p22, %s24, %s15
    %p26 = scmp.ge.s32.totalorder %s25, 2
    %s27 = scalar_select %p26, 0, %s25
    %s28 = ssub.s32 %s15, %s27
    %s29 = ssub.s32 %s16, %s23
    %s30 = sor.u32 %s28, %s29
    %p31 = scmp.eq.s32.totalorder %s30, 0
    %s33 = sadd.s32 %s32, 1
    %s34 = scalar_select %p31, %s32, %s33
    %p37 = pneg %p31
    %p38 = scmp.eq.s32.totalorder %s8, 1
    %p39 = por %p37, %p38
    %p40 = scmp.ne.s32.totalorder %s32, %s35
    %p41 = scmp.eq.s32.totalorder %s8, 0
    %p42 = por %p40, %p41
    %p43 = scmp.ne.s32.totalorder %s32, %s35
    %p44 = scmp.eq.s32.totalorder %s13, 1
    %p45 = por %p43, %p44
    %p46 = scmp.ne.s32.totalorder %s35, %s36
    %p47 = scmp.eq.s32.totalorder %s13, 0
    %p48 = por %p46, %p47
    %p49 = scmp.ne.s32.totalorder %s35, %s36
    %p50 = scmp.eq.s32.totalorder %s14, 1
    %p51 = por %p49, %p50
    %p53 = scmp.ne.s32.totalorder %s36, %s52
    %p54 = scmp.eq.s32.totalorder %s14, 0
    %p55 = por %p53, %p54
    %s56 = ssub.s32 %s15, %s27
    %s57 = ssub.s32 %s16, %s23
    %s58 = sor.u32 %s56, %s57
    %p59 = scmp.eq.s32.totalorder %s58, 0
    %s61 = sadd.s32 %s60, 1
    %s62 = scalar_select %p59, %s60, %s61
    %p65 = pneg %p59
    %p66 = scmp.eq.s32.totalorder %s8, 1
    %p67 = por %p65, %p66
    %p68 = scmp.ne.s32.totalorder %s60, %s63
    %p69 = scmp.eq.s32.totalorder %s8, 0
    %p70 = por %p68, %p69
    %p71 = scmp.ne.s32.totalorder %s60, %s63
    %p72 = scmp.eq.s32.totalorder %s13, 1
    %p73 = por %p71, %p72
    %p74 = scmp.ne.s32.totalorder %s63, %s64
    %p75 = scmp.eq.s32.totalorder %s13, 0
    %p76 = por %p74, %p75
    %p77 = scmp.ne.s32.totalorder %s63, %s64
    %p78 = scmp.eq.s32.totalorder %s14, 1
    %p79 = por %p77, %p78
    %p81 = scmp.ne.s32.totalorder %s64, %s80
    %p82 = scmp.eq.s32.totalorder %s14, 0
    %p83 = por %p81, %p82
    %s84 = ssub.s32 %s15, %s27
    %s85 = ssub.s32 %s16, %s23
    %s86 = sor.u32 %s84, %s85
    %p87 = scmp.eq.s32.totalorder %s86, 0
    %s89 = sadd.s32 %s88, 1
    %s90 = scalar_select %p87, %s88, %s89
    %p93 = pneg %p87
    %p94 = scmp.eq.s32.totalorder %s8, 1
    %p95 = por %p93, %p94
    %p96 = scmp.ne.s32.totalorder %s88, %s91
    %p97 = scmp.eq.s32.totalorder %s8, 0
    %p98 = por %p96, %p97
    %p99 = scmp.ne.s32.totalorder %s88, %s91
    %p100 = scmp.eq.s32.totalorder %s13, 1
    %p101 = por %p99, %p100
    %p102 = scmp.ne.s32.totalorder %s91, %s92
    %p103 = scmp.eq.s32.totalorder %s13, 0
    %p104 = por %p102, %p103
    %p105 = scmp.ne.s32.totalorder %s91, %s92
    %p106 = scmp.eq.s32.totalorder %s14, 1
    %p107 = por %p105, %p106
    %p109 = scmp.ne.s32.totalorder %s92, %s108
    %p110 = scmp.eq.s32.totalorder %s14, 0
    %p111 = por %p109, %p110
    %p112 = scmp.le.s32.totalorder 1, %s8
    %p113 = scmp.lt.s32.totalorder %s8, 3
    %p114 = pnand %p112, %p113
    %p115 = pneg %p114
    // Predicated region
    $region9: #{ohem_ce_loss.1} parent=5 // pred_check
      _
    $region10: #{ohem_ce_loss.1} parent=5 // pred_check_branch
      %117 = sbr.rel (%p114) target = $region12
    $region11: #{ohem_ce_loss.1} parent=5 // pred_region
      %s118 = ssub.s32 %s8, 1
    $region12: #{ohem_ce_loss.1} parent=5 // pred_fallthru
      _
    %p119 = scmp.lt.s32.totalorder %s8, 2
    // Predicated region
    $region13: #{ohem_ce_loss.1} parent=5 // pred_check
      %p120 = pneg %p119
    $region14: #{ohem_ce_loss.1} parent=5 // pred_check_branch
      %122 = sbr.rel (%p120) target = $region16
    $region15: #{ohem_ce_loss.1} parent=5 // pred_region
      // Predicated region
      $region17: #{ohem_ce_loss.1} parent=15 // pred_check
        %p123 = pneg %p42
      $region18: #{ohem_ce_loss.1} parent=15 // pred_check_branch
        %125 = sbr.rel (%p123) target = $region20
      $region19: #{ohem_ce_loss.1} parent=15 // pred_region
        %p126 = scmp.lt.s32.totalorder %s15, 1
        %s127 = scalar_select %p126, %s15, 1
        %p128 = scmp.lt.s32.totalorder %s16, 0
        %s129 = scalar_select %p128, %s16, 0
        %s130 = smul.addr %s127, 4
        %s131 = sadd.s32 %s129, %s130
        %s132 = smul.addr %s131, 2
        %s133 = scalar_lea.vmem %s0, %s132
      $region20: #{ohem_ce_loss.1} parent=15 // pred_fallthru
        _
      // Predicated region
      $region21: #{ohem_ce_loss.1} parent=15 // pred_check
        %p134 = pneg %p70
      $region22: #{ohem_ce_loss.1} parent=15 // pred_check_branch
        %136 = sbr.rel (%p134) target = $region24
      $region23: #{ohem_ce_loss.1} parent=15 // pred_region
        %p137 = scmp.lt.s32.totalorder %s15, 1
        %s138 = scalar_select %p137, %s15, 1
        %p139 = scmp.lt.s32.totalorder %s16, 0
        %s140 = scalar_select %p139, %s16, 0
        %s141 = sadd.s32 %s140, %s138
        %s142 = smul.addr %s141, 2
        %s143 = scalar_lea.vmem %s1, %s142
      $region24: #{ohem_ce_loss.1} parent=15 // pred_fallthru
        _
    $region16: #{ohem_ce_loss.1} parent=5 // pred_fallthru
      _
    %p144 = scmp.le.s32.totalorder 1, %s8
    %p145 = scmp.lt.s32.totalorder %s8, 3
    %p146 = pnand %p144, %p145
    %p147 = pneg %p146
    // Predicated region
    $region25: #{ohem_ce_loss.1} parent=5 // pred_check
      _
    $region26: #{ohem_ce_loss.1} parent=5 // pred_check_branch
      %149 = sbr.rel (%p146) target = $region28
    $region27: #{ohem_ce_loss.1} parent=5 // pred_region
      %s150 = ssub.s32 %s8, 1
      %p151 = scmp.lt.s32.totalorder %s17, 1
      %s152 = scalar_select %p151, %s17, 1
      %p153 = scmp.lt.s32.totalorder %s18, 0
      %s154 = scalar_select %p153, %s18, 0
      %s155 = smul.addr %s152, 4
      %s156 = sadd.s32 %s154, %s155
      %s157 = smul.addr %s156, 2
      %s158 = scalar_lea.vmem %s0, %s157
      %p159 = pneg %p48
      %p160 = pneg %p45
      %p161 = scmp.lt.s32.totalorder %s17, 1
      %s162 = scalar_select %p161, %s17, 1
      %p163 = scmp.lt.s32.totalorder %s18, 0
      %s164 = scalar_select %p163, %s18, 0
      %s165 = sadd.s32 %s164, %s162
      %s166 = smul.addr %s165, 2
      %s167 = scalar_lea.vmem %s1, %s166
      %p168 = pneg %p76
      %p169 = pneg %p73
      %p170 = pneg %p104
      %p171 = pneg %p101
      %p172 = scmp.lt.s32.totalorder %s17, 1
      %s173 = scalar_select %p172, %s17, 1
      %p174 = scmp.lt.s32.totalorder %s18, 0
      %s175 = scalar_select %p174, %s18, 0
      %s176 = sadd.s32 %s175, %s173
      %s177 = smul.addr %s176, 2
      %s178 = scalar_lea.vmem %s2, %s177
      %p179 = scmp.lt.s32.totalorder %s17, 1
      %s180 = scalar_select %p179, %s17, 1
      %p181 = scmp.lt.s32.totalorder %s18, 0
      %s182 = scalar_select %p181, %s18, 0
      %s183 = smul.addr %s180, 4
      %s184 = sadd.s32 %s182, %s183
      %s185 = smul.addr %s184, 2
      %s186 = scalar_lea.vmem %s0, %s185
      %p187 = scmp.lt.s32.totalorder %s17, 1
      %s188 = scalar_select %p187, %s17, 1
      %p189 = scmp.lt.s32.totalorder %s18, 0
      %s190 = scalar_select %p189, %s18, 0
      %s191 = sadd.s32 %s190, %s188
      %s192 = smul.addr %s191, 2
      %s193 = scalar_lea.vmem %s1, %s192
      %p194 = scmp.lt.s32.totalorder %s17, 1
      %s195 = scalar_select %p194, %s17, 1
      %p196 = scmp.lt.s32.totalorder %s18, 0
      %s197 = scalar_select %p196, %s18, 0
      %s198 = sadd.s32 %s197, %s195
      %s199 = smul.addr %s198, 2
      %s200 = scalar_lea.vmem %s2, %s199
      %v201 = vld [vmem:[%s193] sm:$0x3]
      %v202 = vld [vmem:[%s186] sm:$0x3]
      %s203 = scalar_lea.vmem %s186, 2
      %v204 = vld [vmem:[%s203] sm:$0x3]
      %v205 = vmax.f32 %v202, %v204
      %s206 = scalar_lea.vmem %s186, 4
      %v207 = vld [vmem:[%s206] sm:$0x3]
      %v208 = vmax.f32 %v205, %v207
      %s209 = scalar_lea.vmem %s186, 6
      %v210 = vld [vmem:[%s209] sm:$0x3]
      %v211 = vmax.f32 %v208, %v210
      %v212 = vsub.f32 %v202, %v211
      %v213 = vmul.f32 %v212, 1.442695
      %v214 = vpow.pop %v213
      %v215 = vadd.f32 %v214, 0.0
      %vm216 = vcmp.eq.s32.totalorder %v201, 0
      %v217 = vsel %vm216, %v202, 0.0
      %v218 = vadd.f32 %v217, 0.0
      %v219 = vsub.f32 %v204, %v211
      %v220 = vmul.f32 %v219, 1.442695
      %v221 = vpow.pop %v220
      %v222 = vadd.f32 %v215, %v221
      %vm223 = vcmp.eq.s32.totalorder %v201, 1
      %v224 = vsel %vm223, %v204, 0.0
      %v225 = vadd.f32 %v218, %v224
      %v226 = vsub.f32 %v207, %v211
      %v227 = vmul.f32 %v226, 1.442695
      %v228 = vpow.pop %v227
      %v229 = vadd.f32 %v222, %v228
      %vm230 = vcmp.eq.s32.totalorder %v201, 2
      %v231 = vsel %vm230, %v207, 0.0
      %v232 = vadd.f32 %v225, %v231
      %v233 = vsub.f32 %v210, %v211
      %v234 = vmul.f32 %v233, 1.442695
      %v235 = vpow.pop %v234
      %v236 = vadd.f32 %v229, %v235
      %vm237 = vcmp.eq.s32.totalorder %v201, 3
      %v238 = vsel %vm237, %v210, 0.0
      %v239 = vadd.f32 %v232, %v238
      %v240 = vlog2.pop %v236
      %v241 = vmul.f32 %v240, 0.6931472
      %v242 = vadd.f32 %v241, %v211
      %v243 = vsub.f32 %v242, %v239
      %vm244 = vcmp.ne.s32.totalorder %v201, 255
      %v245 = vsel %vm244, %v243, 0.0
      %246 = vst [vmem:[%s200] sm:$0x3] %v245
      %p247 = scmp.lt.s32.totalorder %s17, 1
      %s248 = scalar_select %p247, %s17, 1
      %p249 = scmp.lt.s32.totalorder %s18, 0
      %s250 = scalar_select %p249, %s18, 0
      %s251 = sadd.s32 %s250, %s248
      %s252 = smul.addr %s251, 2
      %s253 = scalar_lea.vmem %s2, %s252
      // Predicated region
      $region29: #{ohem_ce_loss.1} parent=27 // pred_check
        %p254 = pneg %p101
      $region30: #{ohem_ce_loss.1} parent=27 // pred_check_branch
        %256 = sbr.rel (%p254) target = $region32
      $region31: #{ohem_ce_loss.1} parent=27 // pred_region
        _
      $region32: #{ohem_ce_loss.1} parent=27 // pred_fallthru
        _
    $region28: #{ohem_ce_loss.1} parent=5 // pred_fallthru
      _
    %p257 = scmp.le.s32.totalorder 2, %s8
    // Predicated region
    $region33: #{ohem_ce_loss.1} parent=5 // pred_check
      %p258 = pneg %p257
    $region34: #{ohem_ce_loss.1} parent=5 // pred_check_branch
      %260 = sbr.rel (%p258) target = $region36
    $region35: #{ohem_ce_loss.1} parent=5 // pred_region
      %s261 = ssub.s32 %s8, 2
      // Predicated region
      $region37: #{ohem_ce_loss.1} parent=35 // pred_check
        %p262 = pneg %p107
      $region38: #{ohem_ce_loss.1} parent=35 // pred_check_branch
        %264 = sbr.rel (%p262) target = $region40
      $region39: #{ohem_ce_loss.1} parent=35 // pred_region
        %p265 = scmp.lt.s32.totalorder %s19, 1
        %s266 = scalar_select %p265, %s19, 1
        %p267 = scmp.lt.s32.totalorder %s20, 0
        %s268 = scalar_select %p267, %s20, 0
        %s269 = sadd.s32 %s268, %s266
        %s270 = smul.addr %s269, 2
        %s271 = scalar_lea.vmem %s2, %s270
      $region40: #{ohem_ce_loss.1} parent=35 // pred_fallthru
        _
    $region36: #{ohem_ce_loss.1} parent=5 // pred_fallthru
      _
  $region6: #{ohem_ce_loss.1} parent=0 // loop_footer
    %s12 = sadd.s32 1, %s8
  $region7: #{ohem_ce_loss.1} parent=0 // loop_footer_branch
    %7 = sbr.rel target = $region3
  $region8: #{ohem_ce_loss.1} parent=0 // loop_exit
    _

</llo_original>
